<compile_context>
chip_gen: v6e
topology: v6e:2x2x1
jax: 0.10.0
libtpu: 0.0.40
codegen_flags: <defaults>
</compile_context>

<pallas_src>
from itertools import combinations

import numpy as np
import jax
import jax.numpy as jnp
from jax.experimental import pallas as pl
from jax.experimental.pallas import tpu as pltpu  # noqa: F401  (TPU backend)

_EPS = 1e-8    # F.cosine_similarity default eps
_KPAD = 128    # lane-dense output width (queue rows padded 40 -> 128)


# ----------------------------------------------------------------------------
# Kernel: pdist_v2(embeddings, queue_padded) with cosine metric -> (B, KPAD)
#   dist[i, j] = 1 - <e_i / max(||e_i||, eps), q_j / max(||q_j||, eps)>
# Single MXU matmul on pre-normalized rows; rsqrt goes to the EUP; the store
# is a lane-dense (8, 128) tile.
# ----------------------------------------------------------------------------
def _cosine_dist_matrix_kernel(e_ref, q_ref, o_ref):
    e = e_ref[...]                                     # (B, D)   f32
    q = q_ref[...]                                     # (KPAD, D) f32 (zero-padded rows)
    inv_e = jax.lax.rsqrt(
        jnp.maximum(jnp.sum(e * e, axis=-1, keepdims=True), _EPS * _EPS))
    inv_q = jax.lax.rsqrt(
        jnp.maximum(jnp.sum(q * q, axis=-1, keepdims=True), _EPS * _EPS))
    en = e * inv_e
    qn = q * inv_q
    dots = jax.lax.dot_general(                        # (B, KPAD) via MXU
        en, qn, (((1,), (1,)), ((), ())), preferred_element_type=jnp.float32)
    o_ref[...] = 1.0 - dots


def cosine_dist_matrix(embeddings, queue, k_pad=_KPAD):
    """Returns a lane-dense (B, k_pad) distance matrix; caller slices [:, :K]."""
    B, D = embeddings.shape
    K, _ = queue.shape
    assert K <= k_pad
    queue_p = jnp.zeros((k_pad, D), dtype=jnp.float32).at[:K].set(queue)
    return pl.pallas_call(
        _cosine_dist_matrix_kernel,
        out_shape=jax.ShapeDtypeStruct((B, k_pad), jnp.float32),
        in_specs=[pl.BlockSpec((B, D), lambda: (0, 0)),
                  pl.BlockSpec((k_pad, D), lambda: (0, 0))],
        out_specs=pl.BlockSpec((B, k_pad), lambda: (0, 0)),
    )(embeddings, queue_p)


# ----------------------------------------------------------------------------
# Host-side triplet mining (mirrors NegativeTripletSelector.get_global_triplets
# with sampling_strategy='adapted_hard').
# ----------------------------------------------------------------------------
def _get_global_triplets(dist_mat, labels, label_q, queue_ptr, batch_size):
    # dist_mat: (B, K) numpy; labels: (B,) numpy; label_q: (K,) numpy
    anchors, positives, negatives = [], [], []
    unique_labels = np.unique(labels)
    assert -1 not in unique_labels
    for label in unique_labels:
        local_mask = labels == label
        global_mask = label_q == float(label)
        pos_indices = np.where(local_mask)[0]
        if pos_indices.shape[0] < 2:
            continue
        neg_indices = np.where(np.logical_not(global_mask))[0]
        if neg_indices.shape[0] == 0:
            continue
        for a, p in combinations(pos_indices, 2):
            anchor_idx = int(a)
            pos_idx = int(queue_ptr - batch_size + int(p))
            an_dists = dist_mat[anchor_idx, neg_indices]
            # Reference 'adapted_hard' sampler has no return statement -> None,
            # so the hardest_easy_sampling fallback (argmin of an_dists) always
            # fires; the reference appends that *local* argmin index directly
            # (not mapped through neg_indices) — reproduced exactly here.
            neg_idx = int(np.argmin(an_dists))
            anchors.append(anchor_idx)
            positives.append(pos_idx)
            negatives.append(neg_idx)
    return anchors, positives, negatives


# ----------------------------------------------------------------------------
# Module wrapper (JAX state, deterministic init)
# ----------------------------------------------------------------------------
class MemTripletLossPallas:
    def __init__(self, margin, dist_metric='cosine', *, key):
        assert dist_metric == 'cosine', "kernel implements the cosine branch"
        self.K = 40
        self.dim = 128
        self.margin = float(margin)
        q = jax.random.normal(key, (self.K, self.dim), dtype=jnp.float32)
        self.queue = q / jnp.linalg.norm(q, axis=1, keepdims=True)
        self.label_q = jnp.full((self.K,), -1.0, dtype=jnp.float32)
        self.queue_ptr = 0

    def __call__(self, embeddings, labels, sampling_strategy='adapted_hard'):
        B = embeddings.shape[0]
        assert self.K % B == 0

        emb_f32 = embeddings.astype(jnp.float32)   # cast exactly once

        # _dequeue_and_enqueue (single-device path)
        ptr = self.queue_ptr
        self.queue = self.queue.at[ptr:ptr + B, :].set(emb_f32)
        self.label_q = self.label_q.at[ptr:ptr + B].set(labels.astype(jnp.float32))
        self.queue_ptr = (ptr + B) % self.K

        # Pallas kernel: lane-dense (B, 128) cosine-distance matrix.
        dist_full = cosine_dist_matrix(emb_f32, self.queue)
        dist_mat = dist_full[:, :self.K]           # (B, K) valid columns

        # TODO(synk): mining stays on host (data-dependent unique-label /
        # combinations control flow); an on-device formulation would remove
        # this device->host sync, which dominates wall time here.
        anchors, positives, negatives = _get_global_triplets(
            np.asarray(dist_mat), np.asarray(labels),
            np.asarray(self.label_q), self.queue_ptr, B)

        n_triplets = len(anchors)
        if n_triplets == 0:
            # torch: zeros(1).mean() == 0.0
            return jnp.zeros((), dtype=jnp.float32), 0

        a_idx = jnp.asarray(anchors, dtype=jnp.int32)
        # '% K' reproduces torch's negative-index wrap when queue_ptr wrapped;
        # identical row selection, identical loss.
        p_idx = jnp.asarray(positives, dtype=jnp.int32) % self.K
        n_idx = jnp.asarray(negatives, dtype=jnp.int32)

        # ap/an are exact entries of dist_mat (same cosine formula the torch
        # forward recomputes), so no second kernel / re-gather is needed.
        ap = dist_mat[a_idx, p_idx]
        an = dist_mat[a_idx, n_idx]
        loss = jnp.mean(jnp.maximum(ap - an + self.margin, 0.0))
        return loss, n_triplets


if __name__ == "__main__":
    key = jax.random.PRNGKey(0)
    k_emb, k_queue = jax.random.split(key)

    B, D = 8, 128  # dim is fixed to 128 by the module; K=40, K % B == 0
    embeddings = jax.random.normal(k_emb, (B, D), dtype=jnp.float32)
    labels = jnp.array([0, 0, 1, 1, 2, 2, 3, 3], dtype=jnp.int32)

    # Standalone sanity check of the Pallas distance kernel vs pure JAX.
    q_test = jax.random.normal(jax.random.PRNGKey(1), (40, D), dtype=jnp.float32)
    d_pallas = np.asarray(cosine_dist_matrix(embeddings, q_test)[:, :40])
    en = embeddings / jnp.linalg.norm(embeddings, axis=1, keepdims=True)
    qn = q_test / jnp.linalg.norm(q_test, axis=1, keepdims=True)
    d_ref = np.asarray(1.0 - en @ qn.T)
    assert np.allclose(d_pallas, d_ref, atol=1e-5), "dist-matrix kernel mismatch"

    module = MemTripletLossPallas(margin=0.2, dist_metric='cosine', key=k_queue)
    loss, n_triplets = module(embeddings, labels,
                              sampling_strategy='adapted_hard')
    jax.block_until_ready(loss)
    assert np.isfinite(np.asarray(loss)), "loss is not finite"
    print("KERNEL_OK")
</pallas_src>

<mosaic_0001>
module attributes {stable_mosaic.version = 11 : i64} {
  func.func @_cosine_dist_matrix_kernel(%arg0: memref<8x128xf32, #tpu.memory_space<vmem>>, %arg1: memref<128x128xf32, #tpu.memory_space<vmem>>, %arg2: memref<8x128xf32, #tpu.memory_space<vmem>>) attributes {dimension_semantics = [], scalar_prefetch = 0 : i64, scratch_operands = 0 : i64, tpu.core_type = #tpu.core_type<tc>} {
    %c0 = arith.constant 0 : index
    %c0_0 = arith.constant 0 : index
    %0 = vector.load %arg0[%c0, %c0_0] : memref<8x128xf32, #tpu.memory_space<vmem>>, vector<8x128xf32>
    %c0_1 = arith.constant 0 : index
    %c0_2 = arith.constant 0 : index
    %1 = vector.load %arg1[%c0_1, %c0_2] : memref<128x128xf32, #tpu.memory_space<vmem>>, vector<128x128xf32>
    %2 = arith.mulf %0, %0 : vector<8x128xf32>
    %cst = arith.constant dense<0.000000e+00> : vector<8xf32>
    %3 = vector.multi_reduction <add>, %2, %cst [1] : vector<8x128xf32> to vector<8xf32>
    %4 = vector.shape_cast %3 : vector<8xf32> to vector<8x1xf32>
    %cst_3 = arith.constant 1.000000e-16 : f32
    %5 = vector.broadcast %cst_3 : f32 to vector<8x1xf32>
    %6 = arith.maximumf %4, %5 : vector<8x1xf32>
    %7 = math.rsqrt %6 : vector<8x1xf32>
    %8 = arith.mulf %1, %1 : vector<128x128xf32>
    %cst_4 = arith.constant dense<0.000000e+00> : vector<128xf32>
    %9 = vector.multi_reduction <add>, %8, %cst_4 [1] : vector<128x128xf32> to vector<128xf32>
    %10 = vector.shape_cast %9 : vector<128xf32> to vector<128x1xf32>
    %cst_5 = arith.constant 1.000000e-16 : f32
    %11 = vector.broadcast %cst_5 : f32 to vector<128x1xf32>
    %12 = arith.maximumf %10, %11 : vector<128x1xf32>
    %13 = math.rsqrt %12 : vector<128x1xf32>
    %14 = vector.broadcast %7 : vector<8x1xf32> to vector<8x128xf32>
    %15 = arith.mulf %0, %14 : vector<8x128xf32>
    %16 = vector.broadcast %13 : vector<128x1xf32> to vector<128x128xf32>
    %17 = arith.mulf %1, %16 : vector<128x128xf32>
    %cst_6 = arith.constant dense<0.000000e+00> : vector<8x128xf32>
    %18 = tpu.matmul %15, %17, %cst_6 {dimension_numbers = #tpu.dot_dimension_numbers<[1], [1], [0], [0], [0, 0, 1, 0], [], []>} : vector<8x128xf32>, vector<128x128xf32>, vector<8x128xf32> -> vector<8x128xf32>
    %cst_7 = arith.constant 1.000000e+00 : f32
    %19 = vector.broadcast %cst_7 : f32 to vector<8x128xf32>
    %20 = arith.subf %19, %18 : vector<8x128xf32>
    %c0_8 = arith.constant 0 : index
    %c0_9 = arith.constant 0 : index
    %21 = vector.load %arg2[%c0_8, %c0_9] : memref<8x128xf32, #tpu.memory_space<vmem>>, vector<8x128xf32>
    tpu.vector_store %arg2[%c0_8, %c0_9], %20 {strides = array<i32>} : memref<8x128xf32, #tpu.memory_space<vmem>>, vector<8x128xf32>,
    return
  }
}

</mosaic_0001>

<llo_original>
// kernel: tpu_custom_call.1
$region0: #{tpu_custom_call.1}
  #allocation0 [shape = 'u32[]', space=smem, size = 0x4, offset = 0x4, fixed_abs, tag = 'smem constant byte address 0x4 - core index']
  #allocation1 [shape = 'u32[144,128]{1,0:T(1,128)}', space=vmem, size = 0x12000, scoped, tag = 'internal scratch']
  %s0 = inlined_call_operand.hbm [shape: f32[8,128], index: 0, kind: input, shape index: {}]
  %s1 = inlined_call_operand.hbm [shape: f32[128,128], index: 1, kind: input, shape index: {}]
  %s2 = inlined_call_operand.hbm [shape: f32[8,128], index: 2, kind: output, shape index: {}]
  %s3 = sld [smem:[#allocation0]]
  $region26: #{tpu_custom_call.1} parent=0
    _
  %s5 = ssub.s32 1, %s3
  %s6 = scalar_select 0, %s5, %s3
  $region1: #{tpu_custom_call.1} parent=0
    #allocation2 [shape = 'u8[4096]{0}', space=vmem, size = 0x1000, scoped, tag = 'input window, operand 0, single buffered']
    #allocation3 [shape = 's32[1]{0}', space=sflag, size = 0x4, scoped, tag = 'scoped memory for tpu_custom_call.1']
    #allocation4 [shape = 's32[1]{0}', space=sflag, size = 0x4, scoped, tag = 'scoped memory for tpu_custom_call.1']
    #allocation5 [shape = 'u8[65536]{0}', space=vmem, size = 0x10000, scoped, tag = 'input window, operand 1, single buffered']
    #allocation6 [shape = 's32[1]{0}', space=sflag, size = 0x4, scoped, tag = 'scoped memory for tpu_custom_call.1']
    #allocation7 [shape = 'u8[4096]{0}', space=vmem, size = 0x1000, scoped, tag = 'output window, operand 0, single buffered']
    %7 = vsyncpa [#allocation3], 0
    %8 = vsyncpa [#allocation6], 0
    %9 = vsyncpa [#allocation4], 0
    // Predicated region
    $region2: #{tpu_custom_call.1} parent=1 // pred_check
      _
    $region3: #{tpu_custom_call.1} parent=1 // pred_check_branch
      %11 = sbr.rel (0) target = $region5
    $region4: #{tpu_custom_call.1} parent=1 // pred_region
      %s13 = ssub.s32 128, 128
      %14 = vsyncadd [#allocation3], %s13
      %s16 = sshll.u32 [#allocation2], 4
      %s17 = int_to_ptr.vmem [resolvable:$true] %s16
      %19 = dma.hbm_to_vmem [thread:$0]  %s0, 128, %s17, [#allocation3]
    $region5: #{tpu_custom_call.1} parent=1 // pred_fallthru
      _
    // Predicated region
    $region6: #{tpu_custom_call.1} parent=1 // pred_check
      _
    $region7: #{tpu_custom_call.1} parent=1 // pred_check_branch
      %21 = sbr.rel (0) target = $region9
    $region8: #{tpu_custom_call.1} parent=1 // pred_region
      %s23 = ssub.s32 2048, 2048
      %24 = vsyncadd [#allocation6], %s23
      %s25 = sshll.u32 [#allocation5], 4
      %s26 = int_to_ptr.vmem [resolvable:$true] %s25
      %31 = dma.hbm_to_vmem [thread:$0]  %s1, 2048, %s26, [#allocation6], 128, 128, 8
    $region9: #{tpu_custom_call.1} parent=1 // pred_fallthru
      _
    // Predicated region
    $region10: #{tpu_custom_call.1} parent=1 // pred_check
      _
    $region11: #{tpu_custom_call.1} parent=1 // pred_check_branch
      %33 = sbr.rel (0) target = $region13
    $region12: #{tpu_custom_call.1} parent=1 // pred_region
      %34 = dma.done [#allocation3], 128
    $region13: #{tpu_custom_call.1} parent=1 // pred_fallthru
      _
    // Predicated region
    $region14: #{tpu_custom_call.1} parent=1 // pred_check
      _
    $region15: #{tpu_custom_call.1} parent=1 // pred_check_branch
      %36 = sbr.rel (0) target = $region17
    $region16: #{tpu_custom_call.1} parent=1 // pred_region
      %37 = dma.done [#allocation6], 2048
    $region17: #{tpu_custom_call.1} parent=1 // pred_fallthru
      _
    %v38 = vld [vmem:[#allocation2] sm:$0xff]
    %v39 = vld [vmem:[#allocation5] sm:$0xff]
    %v40 = vld [vmem:[#allocation5 + $0x8] sm:$0xff]
    %v41 = vld [vmem:[#allocation5 + $0x10] sm:$0xff]
    %v42 = vld [vmem:[#allocation5 + $0x18] sm:$0xff]
    %v43 = vld [vmem:[#allocation5 + $0x20] sm:$0xff]
    %v44 = vld [vmem:[#allocation5 + $0x28] sm:$0xff]
    %v45 = vld [vmem:[#allocation5 + $0x30] sm:$0xff]
    %v46 = vld [vmem:[#allocation5 + $0x38] sm:$0xff]
    %v47 = vld [vmem:[#allocation5 + $0x40] sm:$0xff]
    %v48 = vld [vmem:[#allocation5 + $0x48] sm:$0xff]
    %v49 = vld [vmem:[#allocation5 + $0x50] sm:$0xff]
    %v50 = vld [vmem:[#allocation5 + $0x58] sm:$0xff]
    %v51 = vld [vmem:[#allocation5 + $0x60] sm:$0xff]
    %v52 = vld [vmem:[#allocation5 + $0x68] sm:$0xff]
    %v53 = vld [vmem:[#allocation5 + $0x70] sm:$0xff]
    %v54 = vld [vmem:[#allocation5 + $0x78] sm:$0xff]
    %v55 = vmul.f32 %v38, %v38
    %56 = vadd.xlane.f32.xlu0 %v55
    %v57 = vpop.xlane.xlu0 %56
    %v58 = vmax.f32 %v57, 1e-16
    %v59 = vrsqrt.pop %v58
    %v60 = vmul.f32 %v39, %v39
    %v61 = vmul.f32 %v40, %v40
    %v62 = vmul.f32 %v41, %v41
    %v63 = vmul.f32 %v42, %v42
    %v64 = vmul.f32 %v43, %v43
    %v65 = vmul.f32 %v44, %v44
    %v66 = vmul.f32 %v45, %v45
    %v67 = vmul.f32 %v46, %v46
    %v68 = vmul.f32 %v47, %v47
    %v69 = vmul.f32 %v48, %v48
    %v70 = vmul.f32 %v49, %v49
    %v71 = vmul.f32 %v50, %v50
    %v72 = vmul.f32 %v51, %v51
    %v73 = vmul.f32 %v52, %v52
    %v74 = vmul.f32 %v53, %v53
    %v75 = vmul.f32 %v54, %v54
    %76 = vadd.xlane.f32.xlu0 %v60
    %v77 = vpop.xlane.xlu0 %76
    %78 = vadd.xlane.f32.xlu0 %v61
    %v79 = vpop.xlane.xlu0 %78
    %80 = vadd.xlane.f32.xlu0 %v62
    %v81 = vpop.xlane.xlu0 %80
    %82 = vadd.xlane.f32.xlu0 %v63
    %v83 = vpop.xlane.xlu0 %82
    %84 = vadd.xlane.f32.xlu0 %v64
    %v85 = vpop.xlane.xlu0 %84
    %86 = vadd.xlane.f32.xlu0 %v65
    %v87 = vpop.xlane.xlu0 %86
    %88 = vadd.xlane.f32.xlu0 %v66
    %v89 = vpop.xlane.xlu0 %88
    %90 = vadd.xlane.f32.xlu0 %v67
    %v91 = vpop.xlane.xlu0 %90
    %92 = vadd.xlane.f32.xlu0 %v68
    %v93 = vpop.xlane.xlu0 %92
    %94 = vadd.xlane.f32.xlu0 %v69
    %v95 = vpop.xlane.xlu0 %94
    %96 = vadd.xlane.f32.xlu0 %v70
    %v97 = vpop.xlane.xlu0 %96
    %98 = vadd.xlane.f32.xlu0 %v71
    %v99 = vpop.xlane.xlu0 %98
    %100 = vadd.xlane.f32.xlu0 %v72
    %v101 = vpop.xlane.xlu0 %100
    %102 = vadd.xlane.f32.xlu0 %v73
    %v103 = vpop.xlane.xlu0 %102
    %104 = vadd.xlane.f32.xlu0 %v74
    %v105 = vpop.xlane.xlu0 %104
    %106 = vadd.xlane.f32.xlu0 %v75
    %v107 = vpop.xlane.xlu0 %106
    %v108 = vmax.f32 %v77, 1e-16
    %v109 = vmax.f32 %v79, 1e-16
    %v110 = vmax.f32 %v81, 1e-16
    %v111 = vmax.f32 %v83, 1e-16
    %v112 = vmax.f32 %v85, 1e-16
    %v113 = vmax.f32 %v87, 1e-16
    %v114 = vmax.f32 %v89, 1e-16
    %v115 = vmax.f32 %v91, 1e-16
    %v116 = vmax.f32 %v93, 1e-16
    %v117 = vmax.f32 %v95, 1e-16
    %v118 = vmax.f32 %v97, 1e-16
    %v119 = vmax.f32 %v99, 1e-16
    %v120 = vmax.f32 %v101, 1e-16
    %v121 = vmax.f32 %v103, 1e-16
    %v122 = vmax.f32 %v105, 1e-16
    %v123 = vmax.f32 %v107, 1e-16
    %v124 = vrsqrt.pop %v108
    %v125 = vrsqrt.pop %v109
    %v126 = vrsqrt.pop %v110
    %v127 = vrsqrt.pop %v111
    %v128 = vrsqrt.pop %v112
    %v129 = vrsqrt.pop %v113
    %v130 = vrsqrt.pop %v114
    %v131 = vrsqrt.pop %v115
    %v132 = vrsqrt.pop %v116
    %v133 = vrsqrt.pop %v117
    %v134 = vrsqrt.pop %v118
    %v135 = vrsqrt.pop %v119
    %v136 = vrsqrt.pop %v120
    %v137 = vrsqrt.pop %v121
    %v138 = vrsqrt.pop %v122
    %v139 = vrsqrt.pop %v123
    %v140 = vmul.f32 %v38, %v59
    %v141 = vmul.f32 %v39, %v124
    %v142 = vmul.f32 %v40, %v125
    %v143 = vmul.f32 %v41, %v126
    %v144 = vmul.f32 %v42, %v127
    %v145 = vmul.f32 %v43, %v128
    %v146 = vmul.f32 %v44, %v129
    %v147 = vmul.f32 %v45, %v130
    %v148 = vmul.f32 %v46, %v131
    %v149 = vmul.f32 %v47, %v132
    %v150 = vmul.f32 %v48, %v133
    %v151 = vmul.f32 %v49, %v134
    %v152 = vmul.f32 %v50, %v135
    %v153 = vmul.f32 %v51, %v136
    %v154 = vmul.f32 %v52, %v137
    %v155 = vmul.f32 %v53, %v138
    %v156 = vmul.f32 %v54, %v139
    %157 = vmatprep.subr.mxu0 0.0
    %158 = vmatpush1.xpose.msra.mxu0 %v156
    %159 = vmatprep.subr.mxu0 0.0
    %160 = vmatpush1.xpose.msra.mxu0 %v155
    %161 = vmatprep.subr.mxu0 0.0
    %162 = vmatpush1.xpose.msra.mxu0 %v154
    %163 = vmatprep.subr.mxu0 0.0
    %164 = vmatpush1.xpose.msra.mxu0 %v153
    %165 = vmatprep.subr.mxu0 0.0
    %166 = vmatpush1.xpose.msra.mxu0 %v152
    %167 = vmatprep.subr.mxu0 0.0
    %168 = vmatpush1.xpose.msra.mxu0 %v151
    %169 = vmatprep.subr.mxu0 0.0
    %170 = vmatpush1.xpose.msra.mxu0 %v150
    %171 = vmatprep.subr.mxu0 0.0
    %172 = vmatpush1.xpose.msra.mxu0 %v149
    %173 = vmatprep.subr.mxu0 0.0
    %174 = vmatpush1.xpose.msra.mxu0 %v148
    %175 = vmatprep.subr.mxu0 0.0
    %176 = vmatpush1.xpose.msra.mxu0 %v147
    %177 = vmatprep.subr.mxu0 0.0
    %178 = vmatpush1.xpose.msra.mxu0 %v146
    %179 = vmatprep.subr.mxu0 0.0
    %180 = vmatpush1.xpose.msra.mxu0 %v145
    %181 = vmatprep.subr.mxu0 0.0
    %182 = vmatpush1.xpose.msra.mxu0 %v144
    %183 = vmatprep.subr.mxu0 0.0
    %184 = vmatpush1.xpose.msra.mxu0 %v143
    %185 = vmatprep.subr.mxu0 0.0
    %186 = vmatpush1.xpose.msra.mxu0 %v142
    %187 = vmatprep.subr.mxu0 0.0
    %188 = vmatpush1.xpose.msra.mxu0 %v141
    %189 = vmatprep.subr.mxu0 0.0
    %190 = vmatpush2.xpose.msra.mxu0 0.0
    %191 = vmatprep.subr.mxu0 0.0
    %192 = vmatpush2.xpose.msra.mxu0 0.0
    %193 = vmatprep.subr.mxu0 0.0
    %194 = vmatpush2.xpose.msra.mxu0 0.0
    %195 = vmatprep.subr.mxu0 0.0
    %196 = vmatpush2.xpose.msra.mxu0 0.0
    %197 = vmatprep.subr.mxu0 0.0
    %198 = vmatpush2.xpose.msra.mxu0 0.0
    %199 = vmatprep.subr.mxu0 0.0
    %200 = vmatpush2.xpose.msra.mxu0 0.0
    %201 = vmatprep.subr.mxu0 0.0
    %202 = vmatpush2.xpose.msra.mxu0 0.0
    %203 = vmatprep.subr.mxu0 0.0
    %204 = vmatpush2.xpose.msra.mxu0 0.0
    %205 = vmatprep.subr.mxu0 0.0
    %206 = vmatpush2.xpose.msra.mxu0 0.0
    %207 = vmatprep.subr.mxu0 0.0
    %208 = vmatpush2.xpose.msra.mxu0 0.0
    %209 = vmatprep.subr.mxu0 0.0
    %210 = vmatpush2.xpose.msra.mxu0 0.0
    %211 = vmatprep.subr.mxu0 0.0
    %212 = vmatpush2.xpose.msra.mxu0 0.0
    %213 = vmatprep.subr.mxu0 0.0
    %214 = vmatpush2.xpose.msra.mxu0 0.0
    %215 = vmatprep.subr.mxu0 0.0
    %216 = vmatpush2.xpose.msra.mxu0 0.0
    %217 = vmatprep.subr.mxu0 0.0
    %218 = vmatpush2.xpose.msra.mxu0 0.0
    %219 = vmatprep.subr.mxu0 0.0
    %220 = vmatpush2.xpose.msra.mxu0 0.0
    %221 = vmatprep.mubr.f32.mxu0 0.0
    %222 = vmatmul.mubr.f32.gmra.mxu0 %v140
    %v223 = vpop.f32.mrf.mxu0
    %v224 = vadd.f32 0.0, %v223
    %v225 = vpop.f32.mrf.mxu0
    %226 = vdwg.mxu0
    %v227 = vsub.f32 1.0, %v224
    %228 = vst [vmem:[#allocation7] sm:$0xff] %v227
    // Predicated region
    $region18: #{tpu_custom_call.1} parent=1 // pred_check
      _
    $region19: #{tpu_custom_call.1} parent=1 // pred_check_branch
      %230 = sbr.rel (0) target = $region21
    $region20: #{tpu_custom_call.1} parent=1 // pred_region
      %s232 = ssub.s32 128, 128
      %233 = vsyncadd [#allocation4], %s232
      %s235 = sshll.u32 [#allocation7], 4
      %s236 = int_to_ptr.vmem [resolvable:$true] %s235
      %238 = dma.vmem_to_hbm [thread:$0]  %s236, 128, %s2, [#allocation4]
    $region21: #{tpu_custom_call.1} parent=1 // pred_fallthru
      _
    // Predicated region
    $region22: #{tpu_custom_call.1} parent=1 // pred_check
      _
    $region23: #{tpu_custom_call.1} parent=1 // pred_check_branch
      %240 = sbr.rel (0) target = $region25
    $region24: #{tpu_custom_call.1} parent=1 // pred_region
      %241 = dma.done [#allocation4], 128
    $region25: #{tpu_custom_call.1} parent=1 // pred_fallthru
      _
    %242 = vsyncpa [#allocation3], 1
    %243 = vsyncpa [#allocation6], 1
    %244 = vsyncpa [#allocation4], 1

</llo_original>
